<compile_context>
chip_gen: v7x
topology: tpu7x:2x2x1
jax: 0.10.0
libtpu: 0.0.40
codegen_flags: <defaults>
</compile_context>

<pallas_src>
import functools

import jax
import jax.numpy as jnp
from jax.experimental import pallas as pl
from jax.experimental.pallas import tpu as pltpu

IN_FEATURES = 2
OUT_FEATURES = 3
_LANE = 128
_SUBLANE = 8
_GRANULE = _LANE * _SUBLANE          # 1024 samples = one dense (8, 128) f32 slab
_MAX_TILE_B = 256 * 1024             # ~5 MB HBM traffic / ~10 MiB dbl-buffered VMEM per step


def svm_kernel(w_ref, b_ref, x_ref, o_ref):
    # w_ref: (OUT, IN) f32 SMEM; b_ref: (OUT,) f32 SMEM.
    # x_ref: (IN, R, 128) f32 VMEM block; o_ref: (OUT, R, 128) f32 VMEM block.
    for o in range(OUT_FEATURES):    # static unroll: 2 VPU FMAs + bias per output row
        o_ref[o] = (w_ref[o, 0] * x_ref[0]
                    + w_ref[o, 1] * x_ref[1]
                    + b_ref[o]).astype(o_ref.dtype)


@functools.partial(jax.jit, static_argnames=("max_tile_b",))
def svm_forward(x, weight, bias, *, max_tile_b=_MAX_TILE_B):
    """x: (B, 2) f32; weight: (3, 2) (torch layout); bias: (3,). Returns (B, 3)."""
    B = x.shape[0]
    if B == 0:  # static shape guard (would otherwise divide by zero below)
        return jnp.zeros((0, OUT_FEATURES), x.dtype)

    # --- tile / pad selection (static Python on shapes) ---------------------
    n_gran = pl.cdiv(B, _GRANULE)                    # batch in 1024-sample granules
    # Fewest steps with each step <= max_tile_b, but >= 2 steps when the batch
    # allows it (lets the "parallel" axis shard across v7x's two TensorCores).
    n_steps = max(pl.cdiv(n_gran * _GRANULE, max_tile_b), min(2, n_gran))
    gran_per_step = pl.cdiv(n_gran, n_steps)
    tile_b = gran_per_step * _GRANULE
    b_pad = n_steps * tile_b                         # pad waste < n_steps granules
    r = tile_b // _LANE                              # sublane rows per block (multiple of 8)

    # --- layout plumbing: (B, IN) -> (IN, b_pad//128, 128) ------------------
    # TODO(synk): if the caller can supply features-major x and/or consume the
    # (OUT, B) output directly, drop these transposes and cut end-to-end HBM
    # traffic ~2-3x; this op is purely bandwidth-bound.
    if b_pad != B:
        x = jnp.pad(x, ((0, b_pad - B), (0, 0)))
    x_t = x.T.reshape(IN_FEATURES, b_pad // _LANE, _LANE)

    y_t = pl.pallas_call(
        svm_kernel,
        out_shape=jax.ShapeDtypeStruct((OUT_FEATURES, b_pad // _LANE, _LANE), x.dtype),
        grid=(n_steps,),
        in_specs=[
            pl.BlockSpec(memory_space=pltpu.MemorySpace.SMEM),            # weight (3, 2)
            pl.BlockSpec(memory_space=pltpu.MemorySpace.SMEM),            # bias   (3,)
            pl.BlockSpec((IN_FEATURES, r, _LANE), lambda i: (0, i, 0)),   # x slab
        ],
        out_specs=pl.BlockSpec((OUT_FEATURES, r, _LANE), lambda i: (0, i, 0)),
        compiler_params=pltpu.CompilerParams(
            dimension_semantics=("parallel",),
            vmem_limit_bytes=32 * 1024 * 1024),
    )(weight, bias, x_t)

    return y_t.reshape(OUT_FEATURES, b_pad)[:, :B].T   # back to (B, OUT)


if __name__ == "__main__":
    key = jax.random.PRNGKey(0)
    kx, kw, kb = jax.random.split(key, 3)

    # Deterministic parameter init (torch.nn.Linear-style uniform bound).
    bound = 1.0 / (IN_FEATURES ** 0.5)
    weight = jax.random.uniform(kw, (OUT_FEATURES, IN_FEATURES),
                                minval=-bound, maxval=bound, dtype=jnp.float32)
    bias = jax.random.uniform(kb, (OUT_FEATURES,),
                              minval=-bound, maxval=bound, dtype=jnp.float32)

    # Small batch: single-step grid, minimal (8, 128) slab.
    B = 8
    x = jax.random.normal(kx, (B, IN_FEATURES), dtype=jnp.float32)
    out = jax.block_until_ready(svm_forward(x, weight, bias))
    ref = x @ weight.T + bias
    assert out.shape == (B, OUT_FEATURES)
    assert jnp.allclose(out, ref, atol=1e-5, rtol=1e-5)

    # Non-granule batch: exercises padding + the 2-step parallel grid.
    B2 = 2500
    x2 = jax.random.normal(kx, (B2, IN_FEATURES), dtype=jnp.float32)
    out2 = jax.block_until_ready(svm_forward(x2, weight, bias))
    ref2 = x2 @ weight.T + bias
    assert out2.shape == (B2, OUT_FEATURES)
    assert jnp.allclose(out2, ref2, atol=1e-5, rtol=1e-5)

    # Edge case: empty batch.
    out0 = jax.block_until_ready(svm_forward(x[:0], weight, bias))
    assert out0.shape == (0, OUT_FEATURES)

    print("KERNEL_OK")
</pallas_src>

<mosaic_0001>
module attributes {stable_mosaic.version = 11 : i64} {
  func.func @svm_kernel(%arg0: i32, %arg1: memref<3x2xf32, #tpu.memory_space<smem>>, %arg2: memref<3xf32, #tpu.memory_space<smem>>, %arg3: memref<2x8x128xf32, #tpu.memory_space<vmem>>, %arg4: memref<3x8x128xf32, #tpu.memory_space<vmem>>) attributes {dimension_semantics = [#tpu.dimension_semantics<parallel>], iteration_bounds = array<i64: 1>, scalar_prefetch = 0 : i64, scratch_operands = 0 : i64, tpu.core_type = #tpu.core_type<tc>, window_params = [{transform_indices = @transform_0, window_bounds = array<i64: 3, 2>}, {transform_indices = @transform_1, window_bounds = array<i64: 3>}, {transform_indices = @transform_2, window_bounds = array<i64: 2, 8, 128>}, {transform_indices = @transform_3, window_bounds = array<i64: 3, 8, 128>}]} {
    %c0 = arith.constant 0 : index
    %c0_0 = arith.constant 0 : index
    %0 = memref.load %arg1[%c0, %c0_0] : memref<3x2xf32, #tpu.memory_space<smem>>
    %c0_1 = arith.constant 0 : index
    %c0_2 = arith.constant 0 : index
    %c0_3 = arith.constant 0 : index
    %1 = vector.load %arg3[%c0_1, %c0_2, %c0_3] : memref<2x8x128xf32, #tpu.memory_space<vmem>>, vector<1x8x128xf32>
    %2 = vector.shape_cast %1 : vector<1x8x128xf32> to vector<8x128xf32>
    %3 = vector.broadcast %0 : f32 to vector<8x128xf32>
    %4 = arith.mulf %3, %2 : vector<8x128xf32>
    %c0_4 = arith.constant 0 : index
    %c1 = arith.constant 1 : index
    %5 = memref.load %arg1[%c0_4, %c1] : memref<3x2xf32, #tpu.memory_space<smem>>
    %c1_5 = arith.constant 1 : index
    %c0_6 = arith.constant 0 : index
    %c0_7 = arith.constant 0 : index
    %6 = vector.load %arg3[%c1_5, %c0_6, %c0_7] : memref<2x8x128xf32, #tpu.memory_space<vmem>>, vector<1x8x128xf32>
    %7 = vector.shape_cast %6 : vector<1x8x128xf32> to vector<8x128xf32>
    %8 = vector.broadcast %5 : f32 to vector<8x128xf32>
    %9 = arith.mulf %8, %7 : vector<8x128xf32>
    %10 = arith.addf %4, %9 : vector<8x128xf32>
    %c0_8 = arith.constant 0 : index
    %11 = memref.load %arg2[%c0_8] : memref<3xf32, #tpu.memory_space<smem>>
    %12 = vector.broadcast %11 : f32 to vector<8x128xf32>
    %13 = arith.addf %10, %12 : vector<8x128xf32>
    %c0_9 = arith.constant 0 : index
    %c0_10 = arith.constant 0 : index
    %c0_11 = arith.constant 0 : index
    %14 = vector.load %arg4[%c0_9, %c0_10, %c0_11] : memref<3x8x128xf32, #tpu.memory_space<vmem>>, vector<1x8x128xf32>
    %15 = vector.shape_cast %14 : vector<1x8x128xf32> to vector<8x128xf32>
    %16 = vector.shape_cast %13 : vector<8x128xf32> to vector<1x8x128xf32>
    tpu.vector_store %arg4[%c0_9, %c0_10, %c0_11], %16 {strides = array<i32>} : memref<3x8x128xf32, #tpu.memory_space<vmem>>, vector<1x8x128xf32>,
    %c1_12 = arith.constant 1 : index
    %c0_13 = arith.constant 0 : index
    %17 = memref.load %arg1[%c1_12, %c0_13] : memref<3x2xf32, #tpu.memory_space<smem>>
    %c0_14 = arith.constant 0 : index
    %c0_15 = arith.constant 0 : index
    %c0_16 = arith.constant 0 : index
    %18 = vector.load %arg3[%c0_14, %c0_15, %c0_16] : memref<2x8x128xf32, #tpu.memory_space<vmem>>, vector<1x8x128xf32>
    %19 = vector.shape_cast %18 : vector<1x8x128xf32> to vector<8x128xf32>
    %20 = vector.broadcast %17 : f32 to vector<8x128xf32>
    %21 = arith.mulf %20, %19 : vector<8x128xf32>
    %c1_17 = arith.constant 1 : index
    %c1_18 = arith.constant 1 : index
    %22 = memref.load %arg1[%c1_17, %c1_18] : memref<3x2xf32, #tpu.memory_space<smem>>
    %c1_19 = arith.constant 1 : index
    %c0_20 = arith.constant 0 : index
    %c0_21 = arith.constant 0 : index
    %23 = vector.load %arg3[%c1_19, %c0_20, %c0_21] : memref<2x8x128xf32, #tpu.memory_space<vmem>>, vector<1x8x128xf32>
    %24 = vector.shape_cast %23 : vector<1x8x128xf32> to vector<8x128xf32>
    %25 = vector.broadcast %22 : f32 to vector<8x128xf32>
    %26 = arith.mulf %25, %24 : vector<8x128xf32>
    %27 = arith.addf %21, %26 : vector<8x128xf32>
    %c1_22 = arith.constant 1 : index
    %28 = memref.load %arg2[%c1_22] : memref<3xf32, #tpu.memory_space<smem>>
    %29 = vector.broadcast %28 : f32 to vector<8x128xf32>
    %30 = arith.addf %27, %29 : vector<8x128xf32>
    %c1_23 = arith.constant 1 : index
    %c0_24 = arith.constant 0 : index
    %c0_25 = arith.constant 0 : index
    %31 = vector.load %arg4[%c1_23, %c0_24, %c0_25] : memref<3x8x128xf32, #tpu.memory_space<vmem>>, vector<1x8x128xf32>
    %32 = vector.shape_cast %31 : vector<1x8x128xf32> to vector<8x128xf32>
    %33 = vector.shape_cast %30 : vector<8x128xf32> to vector<1x8x128xf32>
    tpu.vector_store %arg4[%c1_23, %c0_24, %c0_25], %33 {strides = array<i32>} : memref<3x8x128xf32, #tpu.memory_space<vmem>>, vector<1x8x128xf32>,
    %c2 = arith.constant 2 : index
    %c0_26 = arith.constant 0 : index
    %34 = memref.load %arg1[%c2, %c0_26] : memref<3x2xf32, #tpu.memory_space<smem>>
    %c0_27 = arith.constant 0 : index
    %c0_28 = arith.constant 0 : index
    %c0_29 = arith.constant 0 : index
    %35 = vector.load %arg3[%c0_27, %c0_28, %c0_29] : memref<2x8x128xf32, #tpu.memory_space<vmem>>, vector<1x8x128xf32>
    %36 = vector.shape_cast %35 : vector<1x8x128xf32> to vector<8x128xf32>
    %37 = vector.broadcast %34 : f32 to vector<8x128xf32>
    %38 = arith.mulf %37, %36 : vector<8x128xf32>
    %c2_30 = arith.constant 2 : index
    %c1_31 = arith.constant 1 : index
    %39 = memref.load %arg1[%c2_30, %c1_31] : memref<3x2xf32, #tpu.memory_space<smem>>
    %c1_32 = arith.constant 1 : index
    %c0_33 = arith.constant 0 : index
    %c0_34 = arith.constant 0 : index
    %40 = vector.load %arg3[%c1_32, %c0_33, %c0_34] : memref<2x8x128xf32, #tpu.memory_space<vmem>>, vector<1x8x128xf32>
    %41 = vector.shape_cast %40 : vector<1x8x128xf32> to vector<8x128xf32>
    %42 = vector.broadcast %39 : f32 to vector<8x128xf32>
    %43 = arith.mulf %42, %41 : vector<8x128xf32>
    %44 = arith.addf %38, %43 : vector<8x128xf32>
    %c2_35 = arith.constant 2 : index
    %45 = memref.load %arg2[%c2_35] : memref<3xf32, #tpu.memory_space<smem>>
    %46 = vector.broadcast %45 : f32 to vector<8x128xf32>
    %47 = arith.addf %44, %46 : vector<8x128xf32>
    %c2_36 = arith.constant 2 : index
    %c0_37 = arith.constant 0 : index
    %c0_38 = arith.constant 0 : index
    %48 = vector.load %arg4[%c2_36, %c0_37, %c0_38] : memref<3x8x128xf32, #tpu.memory_space<vmem>>, vector<1x8x128xf32>
    %49 = vector.shape_cast %48 : vector<1x8x128xf32> to vector<8x128xf32>
    %50 = vector.shape_cast %47 : vector<8x128xf32> to vector<1x8x128xf32>
    tpu.vector_store %arg4[%c2_36, %c0_37, %c0_38], %50 {strides = array<i32>} : memref<3x8x128xf32, #tpu.memory_space<vmem>>, vector<1x8x128xf32>,
    return
  }
  func.func @transform_0(%arg0: i32) -> (i32, i32) {
    %c0_i32 = arith.constant 0 : i32
    %c0_i32_0 = arith.constant 0 : i32
    %c0_i32_1 = arith.constant 0 : i32
    return %c0_i32, %c0_i32_0 : i32, i32
  }
  func.func @transform_1(%arg0: i32) -> i32 {
    %c0_i32 = arith.constant 0 : i32
    %c0_i32_0 = arith.constant 0 : i32
    return %c0_i32 : i32
  }
  func.func @transform_2(%arg0: i32) -> (i32, i32, i32) {
    %c0_i32 = arith.constant 0 : i32
    %c0_i32_0 = arith.constant 0 : i32
    %c0_i32_1 = arith.constant 0 : i32
    return %c0_i32, %arg0, %c0_i32_0 : i32, i32, i32
  }
  func.func @transform_3(%arg0: i32) -> (i32, i32, i32) {
    %c0_i32 = arith.constant 0 : i32
    %c0_i32_0 = arith.constant 0 : i32
    %c0_i32_1 = arith.constant 0 : i32
    return %c0_i32, %arg0, %c0_i32_0 : i32, i32, i32
  }
}

</mosaic_0001>

<llo_original>
// kernel: svm_forward.1
$region0: #{svm_forward.1}
  #allocation0 [shape = 'u32[]', space=smem, size = 0x4, offset = 0x4, fixed_abs, tag = 'smem constant byte address 0x4 - core index']
  #allocation1 [shape = 'u32[144,128]{1,0:T(1,128)}', space=vmem, size = 0x12000, scoped, tag = 'internal scratch']
  %s0 = inlined_call_operand.vmem [shape: f32[3,2], index: 0, kind: input, shape index: {}]
  %s1 = inlined_call_operand.vmem [shape: f32[3], index: 1, kind: input, shape index: {}]
  %s2 = inlined_call_operand.vmem [shape: f32[2,8,128], index: 2, kind: input, shape index: {}]
  %s3 = inlined_call_operand.vmem [shape: f32[3,8,128], index: 3, kind: output, shape index: {}]
  %s4 = sld [smem:[#allocation0]]
  $region30: #{svm_forward.1} parent=0
    _
  %s6 = ssub.s32 1, %s4
  %s7 = scalar_select 0, %s6, %s4
  $region1: #{svm_forward.1} parent=0
    #allocation2 [shape = 'u8[2048]{0}', space=smem, size = 0x800, scoped, tag = 'input window, operand 0, single buffered']
    #allocation3 [shape = 's32[1]{0}', space=sflag, size = 0x4, scoped, tag = 'scoped memory for svm_forward.1']
    #allocation4 [shape = 'u8[512]{0}', space=smem, size = 0x200, scoped, tag = 'input window, operand 1, single buffered']
    #allocation5 [shape = 's32[1]{0}', space=sflag, size = 0x4, scoped, tag = 'scoped memory for svm_forward.1']
    %8 = vsyncpa [#allocation3], 0
    %9 = vsyncpa [#allocation5], 0
    // Predicated region
    $region2: #{svm_forward.1} parent=1 // pred_check
      _
    $region3: #{svm_forward.1} parent=1 // pred_check_branch
      %11 = sbr.rel (0) target = $region5
    $region4: #{svm_forward.1} parent=1 // pred_region
      %s13 = ssub.s32 64, 64
      %14 = vsyncadd [#allocation3], %s13
      %s16 = sshll.u32 %s0, 4
      %s17 = int_to_ptr.vmem [resolvable:$true] %s16
      %19 = dma.vmem_to_smem %s17, 64, [#allocation2], [#allocation3]
    $region5: #{svm_forward.1} parent=1 // pred_fallthru
      _
    // Predicated region
    $region6: #{svm_forward.1} parent=1 // pred_check
      _
    $region7: #{svm_forward.1} parent=1 // pred_check_branch
      %21 = sbr.rel (0) target = $region9
    $region8: #{svm_forward.1} parent=1 // pred_region
      %s23 = ssub.s32 16, 16
      %24 = vsyncadd [#allocation5], %s23
      %s26 = sshll.u32 %s1, 4
      %s27 = int_to_ptr.vmem [resolvable:$true] %s26
      %29 = dma.vmem_to_smem %s27, 16, [#allocation4], [#allocation5]
    $region9: #{svm_forward.1} parent=1 // pred_fallthru
      _
    // Predicated region
    $region10: #{svm_forward.1} parent=1 // pred_check
      _
    $region11: #{svm_forward.1} parent=1 // pred_check_branch
      %31 = sbr.rel (0) target = $region13
    $region12: #{svm_forward.1} parent=1 // pred_region
      _
    $region13: #{svm_forward.1} parent=1 // pred_fallthru
      _
    // Predicated region
    $region14: #{svm_forward.1} parent=1 // pred_check
      _
    $region15: #{svm_forward.1} parent=1 // pred_check_branch
      %33 = sbr.rel (0) target = $region17
    $region16: #{svm_forward.1} parent=1 // pred_region
      %34 = dma.done [#allocation3], 64
    $region17: #{svm_forward.1} parent=1 // pred_fallthru
      _
    // Predicated region
    $region18: #{svm_forward.1} parent=1 // pred_check
      _
    $region19: #{svm_forward.1} parent=1 // pred_check_branch
      %36 = sbr.rel (0) target = $region21
    $region20: #{svm_forward.1} parent=1 // pred_region
      %37 = dma.done [#allocation5], 16
    $region21: #{svm_forward.1} parent=1 // pred_fallthru
      _
    %38 = sfence
    %s39 = sld [smem:[#allocation2]]
    %v40 = vld [vmem:[%s2] sm:$0xff]
    %v41 = vstv %s39
    %v42 = vmul.f32 %v41, %v40
    %s43 = sld [smem:[#allocation2 + $0x1]]
    %s44 = scalar_lea.vmem %s2, 8
    %v45 = vld [vmem:[%s44] sm:$0xff]
    %v46 = vstv %s43
    %v47 = vmul.f32 %v46, %v45
    %v48 = vadd.f32 %v42, %v47
    %s49 = sld [smem:[#allocation4]]
    %v50 = vstv %s49
    %v51 = vadd.f32 %v48, %v50
    %52 = vst [vmem:[%s3] sm:$0xff] %v51
    %s53 = sld [smem:[#allocation2 + $0x80]]
    %v54 = vld [vmem:[%s2] sm:$0xff]
    %v55 = vstv %s53
    %v56 = vmul.f32 %v55, %v54
    %s57 = sld [smem:[#allocation2 + $0x81]]
    %v58 = vld [vmem:[%s44] sm:$0xff]
    %v59 = vstv %s57
    %v60 = vmul.f32 %v59, %v58
    %v61 = vadd.f32 %v56, %v60
    %s62 = sld [smem:[#allocation4 + $0x1]]
    %v63 = vstv %s62
    %v64 = vadd.f32 %v61, %v63
    %s65 = scalar_lea.vmem %s3, 8
    %66 = vst [vmem:[%s65] sm:$0xff] %v64
    %s67 = sld [smem:[#allocation2 + $0x100]]
    %v68 = vld [vmem:[%s2] sm:$0xff]
    %v69 = vstv %s67
    %v70 = vmul.f32 %v69, %v68
    %s71 = sld [smem:[#allocation2 + $0x101]]
    %v72 = vld [vmem:[%s44] sm:$0xff]
    %v73 = vstv %s71
    %v74 = vmul.f32 %v73, %v72
    %v75 = vadd.f32 %v70, %v74
    %s76 = sld [smem:[#allocation4 + $0x2]]
    %v77 = vstv %s76
    %v78 = vadd.f32 %v75, %v77
    %s79 = scalar_lea.vmem %s3, 16
    %80 = vst [vmem:[%s79] sm:$0xff] %v78
    // Predicated region
    $region22: #{svm_forward.1} parent=1 // pred_check
      _
    $region23: #{svm_forward.1} parent=1 // pred_check_branch
      %82 = sbr.rel (0) target = $region25
    $region24: #{svm_forward.1} parent=1 // pred_region
      _
    $region25: #{svm_forward.1} parent=1 // pred_fallthru
      _
    // Predicated region
    $region26: #{svm_forward.1} parent=1 // pred_check
      _
    $region27: #{svm_forward.1} parent=1 // pred_check_branch
      %84 = sbr.rel (0) target = $region29
    $region28: #{svm_forward.1} parent=1 // pred_region
      _
    $region29: #{svm_forward.1} parent=1 // pred_fallthru
      _
    %85 = vsyncpa [#allocation3], 1
    %86 = vsyncpa [#allocation5], 1

</llo_original>
